<compile_context>
chip_gen: v5e
topology: v5e:2x2
jax: 0.10.0
libtpu: 0.0.40
codegen_flags: <defaults>
</compile_context>

<pallas_src>
import numpy as np
import jax
import jax.numpy as jnp
from jax.experimental import pallas as pl
from jax.experimental.pallas import tpu as pltpu


def _pick_tile_n(N, tile_n):
    """Largest multiple-of-128 divisor of N that is <= tile_n, preferring a tile
    that yields >= 4 grid steps (>= 2 pipelined steps per TensorCore on v7x)."""
    if N % 128 != 0:
        return N                                   # ragged/small N: one full-width block
    cap = min(tile_n, N)
    divs = [t for t in range(128, cap + 1, 128) if N % t == 0]
    if not divs:
        return N
    for min_steps in (4, 2):
        pref = [t for t in divs if N // t >= min_steps]
        if pref:
            return max(pref)
    return max(divs)


def _pick_chunk(tn, max_chunk):
    """Largest multiple-of-128 divisor of tn that is <= max_chunk."""
    if tn <= max_chunk:
        return tn
    for c in range(max_chunk, 127, -128):
        if tn % c == 0:
            return c
    return tn


def nrbs_forward(x, params, neighbour_id, neighbour_distance, clustering_labels, mu,
                 tile_n=2048, inner_chunk=512):
    We, be, Wd, Wb, bb = params
    B, N = x.shape
    n = We.shape[0]
    m = Wb.shape[0] // n
    k = neighbour_id.shape[1]

    mu_f = float(mu)
    a_scale = 1.0 / 60.0 - 2.0 / (60.0 * mu_f)
    c_scale = 2.0 / (60.0 * mu_f)

    # ---- tiny encoder / bandwidth linears: plain XLA (<<1% of the work) ------
    enc = x.astype(jnp.float32) @ We.T + be                        # (B, n)
    bw = a_scale * jax.nn.sigmoid(enc @ Wb.T + bb) + c_scale       # (B, n*m)
    enc3 = enc.reshape(B, n, 1)                                    # (B, n, 1)
    # fold mu here (O(B*n*m) elements) so the kernel squares w*mu directly
    bw_mu = (bw * mu_f).reshape(B * n, m)                          # (B*n, m), row = b*n + i

    # ---- batch-independent parameter preprocessing (plain JAX) --------------
    onehot = (clustering_labels[None, :] ==
              jnp.arange(m, dtype=clustering_labels.dtype)[:, None]
              ).astype(jnp.float32)                                # (m, N)
    d2 = (neighbour_distance.astype(jnp.float32) ** 2).T           # (k, N)
    # TODO(synk): the data-dependent gather of the decoder basis by neighbour_id
    # has no clean in-kernel Pallas equivalent; it is batch-independent parameter
    # preprocessing, so it is done once here in plain JAX.
    Wg = (jnp.transpose(Wd[:, neighbour_id], (2, 0, 1))            # (k, n, N)
          .reshape(k * n, N)                                       # row = kk*n + i
          .astype(jnp.bfloat16))

    tn = _pick_tile_n(N, tile_n)
    chunk = _pick_chunk(tn, inner_chunk)
    n_chunks = tn // chunk
    grid = (pl.cdiv(N, tn),)

    def decode_kernel(enc_ref, bw_ref, mask_ref, d2_ref, wg_ref, o_ref):
        enc_v = enc_ref[...]                      # (B, n, 1)   tiny, grid-invariant
        bw_v = bw_ref[...]                        # (B*n, m)    already scaled by mu

        # Unrolled lane-chunk loop: keeps the three (B, n, chunk) accumulators in
        # vregs even at tile_n = 2048 instead of spilling to VMEM (all lane
        # windows are static, 128-aligned slices).
        for c in range(n_chunks):
            lanes = slice(c * chunk, (c + 1) * chunk)

            # per-cluster -> per-node bandwidth*mu on the otherwise-idle MXU
            w_mu = jnp.dot(bw_v, mask_ref[:, lanes],
                           preferred_element_type=jnp.float32)     # (B*n, chunk)
            w_mu = w_mu.reshape(B, n, chunk)

            # 1 / (w*mu)^2 on the EUP (otherwise-idle bundle slot)
            inv_s2 = pl.reciprocal(w_mu * w_mu, approx=True)       # (B, n, chunk)

            # unrolled over the (small) neighbour count k; neighbours are loaded
            # in pairs so every bf16 slice of wg starts on a (16,128) tile
            # boundary; kk == 0 initializes the accumulators (peeled).
            win_sum = None
            conv = None
            wg_pair = None
            for kk in range(k):
                if kk % 2 == 0:
                    hi = min(kk + 2, k)
                    wg_pair = wg_ref[kk * n:hi * n, lanes].astype(jnp.float32)
                off = (kk % 2) * n
                wg_k = wg_pair[off:off + n][None]                  # (1, n, chunk)
                d2_k = d2_ref[kk:kk + 1, lanes][None]              # (1, 1, chunk)
                win_k = jnp.maximum(1.0 - d2_k * inv_s2, 0.0)      # (B, n, chunk)
                if kk == 0:
                    win_sum = win_k
                    conv = wg_k * win_k
                else:
                    win_sum = win_sum + win_k
                    conv = conv + wg_k * win_k

            # window normalization (self-neighbour has distance 0 => win_sum >= 1)
            conv = conv * pl.reciprocal(win_sum, approx=True)

            # final contraction over the latent dim n (XLU cross-sublane reduce)
            o_ref[:, lanes] = jnp.sum(enc_v * conv, axis=1)        # (B, chunk)

    cost = pl.CostEstimate(
        flops=int(B * n * N * (6 * k + 2 * m + 6)),
        transcendentals=int(2 * B * n * N),
        bytes_accessed=int(Wg.size * 2 + d2.size * 4 + onehot.size * 4
                           + enc3.size * 4 + bw_mu.size * 4 + B * N * 4),
    )

    out = pl.pallas_call(
        decode_kernel,
        grid=grid,
        in_specs=[
            pl.BlockSpec((B, n, 1), lambda j: (0, 0, 0)),      # enc       (grid-invariant, tiny)
            pl.BlockSpec((B * n, m), lambda j: (0, 0)),        # bw * mu   (grid-invariant, tiny)
            pl.BlockSpec((m, tn), lambda j: (0, j)),           # one-hot cluster masks
            pl.BlockSpec((k, tn), lambda j: (0, j)),           # squared neighbour distances
            pl.BlockSpec((k * n, tn), lambda j: (0, j)),       # gathered decoder basis (bf16)
        ],
        out_specs=pl.BlockSpec((B, tn), lambda j: (0, j)),
        out_shape=jax.ShapeDtypeStruct((B, N), jnp.float32),
        compiler_params=pltpu.CompilerParams(
            dimension_semantics=("parallel",),
            vmem_limit_bytes=32 * 1024 * 1024,
        ),
        cost_estimate=cost,
    )(enc3, bw_mu, onehot, d2, Wg)

    return out


def reference_forward(x, params, neighbour_id, neighbour_distance, clustering_labels, mu):
    """Pure-JAX reproduction of the PyTorch NRBS.forward, for checking."""
    We, be, Wd, Wb, bb = params
    B, N = x.shape
    n = We.shape[0]
    m = Wb.shape[0] // n
    enc = x @ We.T + be                                         # (B, n)
    bw = jax.nn.sigmoid(enc @ Wb.T + bb)                        # (B, n*m)
    bw = (1.0 / 60.0 - 2.0 / (60.0 * mu)) * bw + 2.0 / (60.0 * mu)
    bw = bw.reshape(B, n, m)
    w = bw[:, :, clustering_labels]                             # (B, n, N)
    d = neighbour_distance                                      # (N, k)
    win = jnp.maximum(-(d[None, None, :, :] ** 2) / (w[..., None] * mu) ** 2 + 1.0, 0.0)
    win = win / jnp.sum(win, axis=-1, keepdims=True)
    xg = Wd[:, neighbour_id]                                    # (n, N, k)
    conv = jnp.sum(xg[None] * win, axis=-1)                     # (B, n, N)
    return jnp.einsum('bn,bnj->bj', enc, conv)                  # (B, N)


def _make_case(key, B, N, n, m, k):
    keys = jax.random.split(key, 8)
    lim_e = 1.0 / float(np.sqrt(N))
    lim_b = 1.0 / float(np.sqrt(n))
    We = jax.random.uniform(keys[0], (n, N), jnp.float32, -lim_e, lim_e)      # encoder weight
    be = jax.random.uniform(keys[1], (n,), jnp.float32, -lim_e, lim_e)        # encoder bias
    Wd = jax.random.uniform(keys[2], (n, N), jnp.float32, -lim_e, lim_e)      # decoder weight
    Wb = jax.random.uniform(keys[3], (n * m, n), jnp.float32, -lim_b, lim_b)  # bandwidth weight
    bb = jax.random.uniform(keys[4], (n * m,), jnp.float32, -lim_b, lim_b)    # bandwidth bias

    # neighbour table: first neighbour is the node itself (distance 0)
    nbr_rand = jax.random.randint(keys[5], (N, k - 1), 0, N)
    neighbour_id = jnp.concatenate([jnp.arange(N, dtype=jnp.int32)[:, None],
                                    nbr_rand.astype(jnp.int32)], axis=1)      # (N, k)
    dist_rand = jax.random.uniform(keys[6], (N, k - 1), jnp.float32, 0.0, 0.05)
    neighbour_distance = jnp.concatenate([jnp.zeros((N, 1), jnp.float32), dist_rand], axis=1)
    clustering_labels = jax.random.randint(keys[7], (N,), 0, m)

    x = jax.random.normal(jax.random.fold_in(key, 99), (B, N), jnp.float32)
    return x, (We, be, Wd, Wb, bb), neighbour_id, neighbour_distance, clustering_labels


if __name__ == "__main__":
    mu = 4.0
    base = jax.random.PRNGKey(0)
    # case 0: N=1024 -> tile 256, 1 chunk/tile, grid 4
    # case 1: N=4096 -> tile 1024, 2x512-lane chunks/tile, grid 4
    cases = [(2, 1024, 8, 4, 8), (2, 4096, 8, 4, 8)]
    for idx, (B, N, n, m, k) in enumerate(cases):
        key = jax.random.fold_in(base, idx)
        x, params, nid, nd, labels = _make_case(key, B, N, n, m, k)
        out = jax.block_until_ready(nrbs_forward(x, params, nid, nd, labels, mu))
        ref = reference_forward(x, params, nid, nd, labels, mu)
        np.testing.assert_allclose(np.asarray(out), np.asarray(ref), rtol=5e-3, atol=5e-3)
    print("KERNEL_OK")
</pallas_src>

<mosaic_0001>
module attributes {stable_mosaic.version = 11 : i64} {
  func.func @decode_kernel(%arg0: i32, %arg1: memref<2x8x1xf32, #tpu.memory_space<vmem>>, %arg2: memref<16x4xf32, #tpu.memory_space<vmem>>, %arg3: memref<4x256xf32, #tpu.memory_space<vmem>>, %arg4: memref<8x256xf32, #tpu.memory_space<vmem>>, %arg5: memref<64x256xbf16, #tpu.memory_space<vmem>>, %arg6: memref<2x256xf32, #tpu.memory_space<vmem>>) attributes {dimension_semantics = [#tpu.dimension_semantics<parallel>], iteration_bounds = array<i64: 4>, scalar_prefetch = 0 : i64, scratch_operands = 0 : i64, tpu.core_type = #tpu.core_type<tc>, window_params = [{pipeline_mode = #tpu.pipeline_mode<synchronous>, transform_indices = @transform_0, window_bounds = array<i64: 2, 8, 1>}, {pipeline_mode = #tpu.pipeline_mode<synchronous>, transform_indices = @transform_1, window_bounds = array<i64: 16, 4>}, {transform_indices = @transform_2, window_bounds = array<i64: 4, 256>}, {transform_indices = @transform_3, window_bounds = array<i64: 8, 256>}, {transform_indices = @transform_4, window_bounds = array<i64: 64, 256>}, {transform_indices = @transform_5, window_bounds = array<i64: 2, 256>}]} {
    %c0 = arith.constant 0 : index
    %c0_0 = arith.constant 0 : index
    %c0_1 = arith.constant 0 : index
    %0 = vector.load %arg1[%c0, %c0_0, %c0_1] : memref<2x8x1xf32, #tpu.memory_space<vmem>>, vector<2x8x1xf32>
    %c0_2 = arith.constant 0 : index
    %c0_3 = arith.constant 0 : index
    %1 = vector.load %arg2[%c0_2, %c0_3] : memref<16x4xf32, #tpu.memory_space<vmem>>, vector<16x4xf32>
    %c0_4 = arith.constant 0 : index
    %c0_5 = arith.constant 0 : index
    %2 = vector.load %arg3[%c0_4, %c0_5] : memref<4x256xf32, #tpu.memory_space<vmem>>, vector<4x256xf32>
    %cst = arith.constant dense<0.000000e+00> : vector<16x256xf32>
    %3 = tpu.matmul %1, %2, %cst {dimension_numbers = #tpu.dot_dimension_numbers<[1], [0], [0], [1], [0, 0, 1, 1], [], []>} : vector<16x4xf32>, vector<4x256xf32>, vector<16x256xf32> -> vector<16x256xf32>
    %4 = vector.shape_cast %3 : vector<16x256xf32> to vector<2x8x256xf32>
    %5 = arith.mulf %4, %4 : vector<2x8x256xf32>
    %6 = tpu.reciprocal %5 {approx = true} : vector<2x8x256xf32> -> vector<2x8x256xf32>
    %c0_6 = arith.constant 0 : index
    %c0_7 = arith.constant 0 : index
    %7 = vector.load %arg5[%c0_6, %c0_7] : memref<64x256xbf16, #tpu.memory_space<vmem>>, vector<16x256xbf16>
    %8 = arith.extf %7 : vector<16x256xbf16> to vector<16x256xf32>
    %9 = vector.extract_strided_slice %8 {offsets = [0, 0], sizes = [8, 256], strides = [1, 1]} : vector<16x256xf32> to vector<8x256xf32>
    %10 = vector.shape_cast %9 : vector<8x256xf32> to vector<1x8x256xf32>
    %c0_8 = arith.constant 0 : index
    %c0_9 = arith.constant 0 : index
    %11 = vector.load %arg4[%c0_8, %c0_9] : memref<8x256xf32, #tpu.memory_space<vmem>>, vector<1x256xf32>
    %12 = vector.shape_cast %11 : vector<1x256xf32> to vector<1x1x256xf32>
    %13 = vector.broadcast %12 : vector<1x1x256xf32> to vector<2x8x256xf32>
    %14 = arith.mulf %13, %6 : vector<2x8x256xf32>
    %cst_10 = arith.constant 1.000000e+00 : f32
    %15 = vector.broadcast %cst_10 : f32 to vector<2x8x256xf32>
    %16 = arith.subf %15, %14 : vector<2x8x256xf32>
    %cst_11 = arith.constant 0.000000e+00 : f32
    %17 = vector.broadcast %cst_11 : f32 to vector<2x8x256xf32>
    %18 = arith.maximumf %16, %17 : vector<2x8x256xf32>
    %19 = vector.broadcast %10 : vector<1x8x256xf32> to vector<2x8x256xf32>
    %20 = arith.mulf %19, %18 : vector<2x8x256xf32>
    %21 = vector.extract_strided_slice %8 {offsets = [8, 0], sizes = [8, 256], strides = [1, 1]} : vector<16x256xf32> to vector<8x256xf32>
    %22 = vector.shape_cast %21 : vector<8x256xf32> to vector<1x8x256xf32>
    %c1 = arith.constant 1 : index
    %c0_12 = arith.constant 0 : index
    %23 = vector.load %arg4[%c1, %c0_12] : memref<8x256xf32, #tpu.memory_space<vmem>>, vector<1x256xf32>
    %24 = vector.shape_cast %23 : vector<1x256xf32> to vector<1x1x256xf32>
    %25 = vector.broadcast %24 : vector<1x1x256xf32> to vector<2x8x256xf32>
    %26 = arith.mulf %25, %6 : vector<2x8x256xf32>
    %cst_13 = arith.constant 1.000000e+00 : f32
    %27 = vector.broadcast %cst_13 : f32 to vector<2x8x256xf32>
    %28 = arith.subf %27, %26 : vector<2x8x256xf32>
    %cst_14 = arith.constant 0.000000e+00 : f32
    %29 = vector.broadcast %cst_14 : f32 to vector<2x8x256xf32>
    %30 = arith.maximumf %28, %29 : vector<2x8x256xf32>
    %31 = arith.addf %18, %30 : vector<2x8x256xf32>
    %32 = vector.broadcast %22 : vector<1x8x256xf32> to vector<2x8x256xf32>
    %33 = arith.mulf %32, %30 : vector<2x8x256xf32>
    %34 = arith.addf %20, %33 : vector<2x8x256xf32>
    %c16 = arith.constant 16 : index
    %c0_15 = arith.constant 0 : index
    %35 = vector.load %arg5[%c16, %c0_15] : memref<64x256xbf16, #tpu.memory_space<vmem>>, vector<16x256xbf16>
    %36 = arith.extf %35 : vector<16x256xbf16> to vector<16x256xf32>
    %37 = vector.extract_strided_slice %36 {offsets = [0, 0], sizes = [8, 256], strides = [1, 1]} : vector<16x256xf32> to vector<8x256xf32>
    %38 = vector.shape_cast %37 : vector<8x256xf32> to vector<1x8x256xf32>
    %c2 = arith.constant 2 : index
    %c0_16 = arith.constant 0 : index
    %39 = vector.load %arg4[%c2, %c0_16] : memref<8x256xf32, #tpu.memory_space<vmem>>, vector<1x256xf32>
    %40 = vector.shape_cast %39 : vector<1x256xf32> to vector<1x1x256xf32>
    %41 = vector.broadcast %40 : vector<1x1x256xf32> to vector<2x8x256xf32>
    %42 = arith.mulf %41, %6 : vector<2x8x256xf32>
    %cst_17 = arith.constant 1.000000e+00 : f32
    %43 = vector.broadcast %cst_17 : f32 to vector<2x8x256xf32>
    %44 = arith.subf %43, %42 : vector<2x8x256xf32>
    %cst_18 = arith.constant 0.000000e+00 : f32
    %45 = vector.broadcast %cst_18 : f32 to vector<2x8x256xf32>
    %46 = arith.maximumf %44, %45 : vector<2x8x256xf32>
    %47 = arith.addf %31, %46 : vector<2x8x256xf32>
    %48 = vector.broadcast %38 : vector<1x8x256xf32> to vector<2x8x256xf32>
    %49 = arith.mulf %48, %46 : vector<2x8x256xf32>
    %50 = arith.addf %34, %49 : vector<2x8x256xf32>
    %51 = vector.extract_strided_slice %36 {offsets = [8, 0], sizes = [8, 256], strides = [1, 1]} : vector<16x256xf32> to vector<8x256xf32>
    %52 = vector.shape_cast %51 : vector<8x256xf32> to vector<1x8x256xf32>
    %c3 = arith.constant 3 : index
    %c0_19 = arith.constant 0 : index
    %53 = vector.load %arg4[%c3, %c0_19] : memref<8x256xf32, #tpu.memory_space<vmem>>, vector<1x256xf32>
    %54 = vector.shape_cast %53 : vector<1x256xf32> to vector<1x1x256xf32>
    %55 = vector.broadcast %54 : vector<1x1x256xf32> to vector<2x8x256xf32>
    %56 = arith.mulf %55, %6 : vector<2x8x256xf32>
    %cst_20 = arith.constant 1.000000e+00 : f32
    %57 = vector.broadcast %cst_20 : f32 to vector<2x8x256xf32>
    %58 = arith.subf %57, %56 : vector<2x8x256xf32>
    %cst_21 = arith.constant 0.000000e+00 : f32
    %59 = vector.broadcast %cst_21 : f32 to vector<2x8x256xf32>
    %60 = arith.maximumf %58, %59 : vector<2x8x256xf32>
    %61 = arith.addf %47, %60 : vector<2x8x256xf32>
    %62 = vector.broadcast %52 : vector<1x8x256xf32> to vector<2x8x256xf32>
    %63 = arith.mulf %62, %60 : vector<2x8x256xf32>
    %64 = arith.addf %50, %63 : vector<2x8x256xf32>
    %c32 = arith.constant 32 : index
    %c0_22 = arith.constant 0 : index
    %65 = vector.load %arg5[%c32, %c0_22] : memref<64x256xbf16, #tpu.memory_space<vmem>>, vector<16x256xbf16>
    %66 = arith.extf %65 : vector<16x256xbf16> to vector<16x256xf32>
    %67 = vector.extract_strided_slice %66 {offsets = [0, 0], sizes = [8, 256], strides = [1, 1]} : vector<16x256xf32> to vector<8x256xf32>
    %68 = vector.shape_cast %67 : vector<8x256xf32> to vector<1x8x256xf32>
    %c4 = arith.constant 4 : index
    %c0_23 = arith.constant 0 : index
    %69 = vector.load %arg4[%c4, %c0_23] : memref<8x256xf32, #tpu.memory_space<vmem>>, vector<1x256xf32>
    %70 = vector.shape_cast %69 : vector<1x256xf32> to vector<1x1x256xf32>
    %71 = vector.broadcast %70 : vector<1x1x256xf32> to vector<2x8x256xf32>
    %72 = arith.mulf %71, %6 : vector<2x8x256xf32>
    %cst_24 = arith.constant 1.000000e+00 : f32
    %73 = vector.broadcast %cst_24 : f32 to vector<2x8x256xf32>
    %74 = arith.subf %73, %72 : vector<2x8x256xf32>
    %cst_25 = arith.constant 0.000000e+00 : f32
    %75 = vector.broadcast %cst_25 : f32 to vector<2x8x256xf32>
    %76 = arith.maximumf %74, %75 : vector<2x8x256xf32>
    %77 = arith.addf %61, %76 : vector<2x8x256xf32>
    %78 = vector.broadcast %68 : vector<1x8x256xf32> to vector<2x8x256xf32>
    %79 = arith.mulf %78, %76 : vector<2x8x256xf32>
    %80 = arith.addf %64, %79 : vector<2x8x256xf32>
    %81 = vector.extract_strided_slice %66 {offsets = [8, 0], sizes = [8, 256], strides = [1, 1]} : vector<16x256xf32> to vector<8x256xf32>
    %82 = vector.shape_cast %81 : vector<8x256xf32> to vector<1x8x256xf32>
    %c5 = arith.constant 5 : index
    %c0_26 = arith.constant 0 : index
    %83 = vector.load %arg4[%c5, %c0_26] : memref<8x256xf32, #tpu.memory_space<vmem>>, vector<1x256xf32>
    %84 = vector.shape_cast %83 : vector<1x256xf32> to vector<1x1x256xf32>
    %85 = vector.broadcast %84 : vector<1x1x256xf32> to vector<2x8x256xf32>
    %86 = arith.mulf %85, %6 : vector<2x8x256xf32>
    %cst_27 = arith.constant 1.000000e+00 : f32
    %87 = vector.broadcast %cst_27 : f32 to vector<2x8x256xf32>
    %88 = arith.subf %87, %86 : vector<2x8x256xf32>
    %cst_28 = arith.constant 0.000000e+00 : f32
    %89 = vector.broadcast %cst_28 : f32 to vector<2x8x256xf32>
    %90 = arith.maximumf %88, %89 : vector<2x8x256xf32>
    %91 = arith.addf %77, %90 : vector<2x8x256xf32>
    %92 = vector.broadcast %82 : vector<1x8x256xf32> to vector<2x8x256xf32>
    %93 = arith.mulf %92, %90 : vector<2x8x256xf32>
    %94 = arith.addf %80, %93 : vector<2x8x256xf32>
    %c48 = arith.constant 48 : index
    %c0_29 = arith.constant 0 : index
    %95 = vector.load %arg5[%c48, %c0_29] : memref<64x256xbf16, #tpu.memory_space<vmem>>, vector<16x256xbf16>
    %96 = arith.extf %95 : vector<16x256xbf16> to vector<16x256xf32>
    %97 = vector.extract_strided_slice %96 {offsets = [0, 0], sizes = [8, 256], strides = [1, 1]} : vector<16x256xf32> to vector<8x256xf32>
    %98 = vector.shape_cast %97 : vector<8x256xf32> to vector<1x8x256xf32>
    %c6 = arith.constant 6 : index
    %c0_30 = arith.constant 0 : index
    %99 = vector.load %arg4[%c6, %c0_30] : memref<8x256xf32, #tpu.memory_space<vmem>>, vector<1x256xf32>
    %100 = vector.shape_cast %99 : vector<1x256xf32> to vector<1x1x256xf32>
    %101 = vector.broadcast %100 : vector<1x1x256xf32> to vector<2x8x256xf32>
    %102 = arith.mulf %101, %6 : vector<2x8x256xf32>
    %cst_31 = arith.constant 1.000000e+00 : f32
    %103 = vector.broadcast %cst_31 : f32 to vector<2x8x256xf32>
    %104 = arith.subf %103, %102 : vector<2x8x256xf32>
    %cst_32 = arith.constant 0.000000e+00 : f32
    %105 = vector.broadcast %cst_32 : f32 to vector<2x8x256xf32>
    %106 = arith.maximumf %104, %105 : vector<2x8x256xf32>
    %107 = arith.addf %91, %106 : vector<2x8x256xf32>
    %108 = vector.broadcast %98 : vector<1x8x256xf32> to vector<2x8x256xf32>
    %109 = arith.mulf %108, %106 : vector<2x8x256xf32>
    %110 = arith.addf %94, %109 : vector<2x8x256xf32>
    %111 = vector.extract_strided_slice %96 {offsets = [8, 0], sizes = [8, 256], strides = [1, 1]} : vector<16x256xf32> to vector<8x256xf32>
    %112 = vector.shape_cast %111 : vector<8x256xf32> to vector<1x8x256xf32>
    %c7 = arith.constant 7 : index
    %c0_33 = arith.constant 0 : index
    %113 = vector.load %arg4[%c7, %c0_33] : memref<8x256xf32, #tpu.memory_space<vmem>>, vector<1x256xf32>
    %114 = vector.shape_cast %113 : vector<1x256xf32> to vector<1x1x256xf32>
    %115 = vector.broadcast %114 : vector<1x1x256xf32> to vector<2x8x256xf32>
    %116 = arith.mulf %115, %6 : vector<2x8x256xf32>
    %cst_34 = arith.constant 1.000000e+00 : f32
    %117 = vector.broadcast %cst_34 : f32 to vector<2x8x256xf32>
    %118 = arith.subf %117, %116 : vector<2x8x256xf32>
    %cst_35 = arith.constant 0.000000e+00 : f32
    %119 = vector.broadcast %cst_35 : f32 to vector<2x8x256xf32>
    %120 = arith.maximumf %118, %119 : vector<2x8x256xf32>
    %121 = arith.addf %107, %120 : vector<2x8x256xf32>
    %122 = vector.broadcast %112 : vector<1x8x256xf32> to vector<2x8x256xf32>
    %123 = arith.mulf %122, %120 : vector<2x8x256xf32>
    %124 = arith.addf %110, %123 : vector<2x8x256xf32>
    %125 = tpu.reciprocal %121 {approx = true} : vector<2x8x256xf32> -> vector<2x8x256xf32>
    %126 = arith.mulf %124, %125 : vector<2x8x256xf32>
    %127 = vector.broadcast %0 : vector<2x8x1xf32> to vector<2x8x256xf32>
    %128 = arith.mulf %127, %126 : vector<2x8x256xf32>
    %cst_36 = arith.constant dense<0.000000e+00> : vector<2x256xf32>
    %129 = vector.multi_reduction <add>, %128, %cst_36 [1] : vector<2x8x256xf32> to vector<2x256xf32>
    %c0_37 = arith.constant 0 : index
    %c0_38 = arith.constant 0 : index
    %130 = vector.load %arg6[%c0_37, %c0_38] : memref<2x256xf32, #tpu.memory_space<vmem>>, vector<2x256xf32>
    tpu.vector_store %arg6[%c0_37, %c0_38], %129 {strides = array<i32>} : memref<2x256xf32, #tpu.memory_space<vmem>>, vector<2x256xf32>,
    return
  }
  func.func @transform_0(%arg0: i32) -> (i32, i32, i32) {
    %c0_i32 = arith.constant 0 : i32
    %c0_i32_0 = arith.constant 0 : i32
    %c0_i32_1 = arith.constant 0 : i32
    %c0_i32_2 = arith.constant 0 : i32
    return %c0_i32, %c0_i32_0, %c0_i32_1 : i32, i32, i32
  }
  func.func @transform_1(%arg0: i32) -> (i32, i32) {
    %c0_i32 = arith.constant 0 : i32
    %c0_i32_0 = arith.constant 0 : i32
    %c0_i32_1 = arith.constant 0 : i32
    return %c0_i32, %c0_i32_0 : i32, i32
  }
  func.func @transform_2(%arg0: i32) -> (i32, i32) {
    %c0_i32 = arith.constant 0 : i32
    %c0_i32_0 = arith.constant 0 : i32
    return %c0_i32, %arg0 : i32, i32
  }
  func.func @transform_3(%arg0: i32) -> (i32, i32) {
    %c0_i32 = arith.constant 0 : i32
    %c0_i32_0 = arith.constant 0 : i32
    return %c0_i32, %arg0 : i32, i32
  }
  func.func @transform_4(%arg0: i32) -> (i32, i32) {
    %c0_i32 = arith.constant 0 : i32
    %c0_i32_0 = arith.constant 0 : i32
    return %c0_i32, %arg0 : i32, i32
  }
  func.func @transform_5(%arg0: i32) -> (i32, i32) {
    %c0_i32 = arith.constant 0 : i32
    %c0_i32_0 = arith.constant 0 : i32
    return %c0_i32, %arg0 : i32, i32
  }
}

</mosaic_0001>

<llo_original>
// kernel: tpu_custom_call.1
$region0: #{tpu_custom_call.1}
  #allocation0 [shape = 'u32[]', space=smem, size = 0x4, offset = 0x4, fixed_abs, tag = 'smem constant byte address 0x4 - core index']
  #allocation1 [shape = 'u32[72,128]{1,0:T(1,128)}', space=vmem, size = 0x9000, scoped, tag = 'internal scratch']
  %s0 = inlined_call_operand.vmem [shape: f32[2,8,1], index: 0, kind: input, shape index: {}]
  %s1 = inlined_call_operand.vmem [shape: f32[16,4], index: 1, kind: input, shape index: {}]
  %s2 = inlined_call_operand.vmem [shape: f32[4,1024], index: 2, kind: input, shape index: {}]
  %s3 = inlined_call_operand.hbm [shape: f32[8,1024], index: 3, kind: input, shape index: {}]
  %s4 = inlined_call_operand.hbm [shape: bf16[64,1024], index: 4, kind: input, shape index: {}]
  %s5 = inlined_call_operand.hbm [shape: f32[2,1024], index: 5, kind: output, shape index: {}]
  %s6 = sld [smem:[#allocation0]]
  $region61: #{tpu_custom_call.1} parent=0
    _
  %s8 = ssub.s32 1, %s6
  %s9 = scalar_select 0, %s8, %s6
  $region1: #{tpu_custom_call.1} parent=0
    #allocation2 [shape = 'u8[16384]{0}', space=vmem, size = 0x4000, scoped, tag = 'input window, operand 3']
    #allocation3 [shape = 's32[2]{0}', space=sflag, size = 0x8, scoped, tag = 'scoped memory for tpu_custom_call.1']
    #allocation4 [shape = 's32[2]{0}', space=sflag, size = 0x8, scoped, tag = 'scoped memory for tpu_custom_call.1']
    #allocation5 [shape = 'u8[65536]{0}', space=vmem, size = 0x10000, scoped, tag = 'input window, operand 4']
    #allocation6 [shape = 's32[2]{0}', space=sflag, size = 0x8, scoped, tag = 'scoped memory for tpu_custom_call.1']
    #allocation7 [shape = 'u8[4096]{0}', space=vmem, size = 0x1000, scoped, tag = 'output window, operand 0']
    %10 = vsyncpa [#allocation3], 0
    %s11 = scalar_lea.sflag [#allocation3], 1
    %12 = vsyncpa %s11, 0
    %13 = vsyncpa [#allocation6], 0
    %s14 = scalar_lea.sflag [#allocation6], 1
    %15 = vsyncpa %s14, 0
    %16 = vsyncpa [#allocation4], 0
    %s17 = scalar_lea.sflag [#allocation4], 1
    %18 = vsyncpa %s17, 0
    loop: start=0, step=1, limit=6
    $region2: #{tpu_custom_call.1} parent=1 // loop_pre_header
      _
    $region3: #{tpu_custom_call.1} parent=1 // loop_header
      %s20 = sphi 0, %s24
      %p21 = scmp.ge.s32.totalorder %s20, 6
      %s28 = sphi 0, %s28
      %s30 = sphi 0, %s28
      %s31 = sphi 0, %s30
      %s45 = sphi 0, %s31
      %s49 = sphi 0, %s49
      %s51 = sphi 0, %s49
      %s52 = sphi 0, %s51
      %s66 = sphi 0, %s52
      %s72 = sphi 0, %s74
      %s75 = sphi 0, %s72
      %s76 = sphi 0, %s75
      %s92 = sphi 0, %s76
      %s98 = sphi 0, %s100
      %s101 = sphi 0, %s98
      %s102 = sphi 0, %s101
      %s118 = sphi 0, %s102
      %s124 = sphi 0, %s126
      %s127 = sphi 0, %s124
      %s128 = sphi 0, %s127
      %s144 = sphi 0, %s128
      %s150 = sphi 0, %s152
      %s153 = sphi 0, %s150
      %s154 = sphi 0, %s153
      %s170 = sphi 0, %s154
    $region4: #{tpu_custom_call.1} parent=1 // loop_header_branch
      %23 = sbr.rel (%p21) target = $region8
    $region5: #{tpu_custom_call.1} parent=1 // loop_body
      %s25 = ssub.s32 %s20, 1
      %s26 = ssub.s32 %s20, 2
      %s27 = sadd.s32 %s20, 1
      %s29 = sadd.s32 %s28, 1
      %p32 = scmp.eq.s32.totalorder %s20, 3
      %p33 = scmp.ne.s32.totalorder %s28, %s30
      %p34 = scmp.eq.s32.totalorder %s20, 0
      %p35 = por %p33, %p34
      %p36 = scmp.ne.s32.totalorder %s28, %s30
      %p37 = scmp.eq.s32.totalorder %s25, 3
      %p38 = por %p36, %p37
      %p39 = scmp.ne.s32.totalorder %s30, %s31
      %p40 = scmp.eq.s32.totalorder %s25, 0
      %p41 = por %p39, %p40
      %p42 = scmp.ne.s32.totalorder %s30, %s31
      %p43 = scmp.eq.s32.totalorder %s26, 3
      %p44 = por %p42, %p43
      %p46 = scmp.ne.s32.totalorder %s31, %s45
      %p47 = scmp.eq.s32.totalorder %s26, 0
      %p48 = por %p46, %p47
      %s50 = sadd.s32 %s49, 1
      %p53 = scmp.eq.s32.totalorder %s20, 3
      %p54 = scmp.ne.s32.totalorder %s49, %s51
      %p55 = scmp.eq.s32.totalorder %s20, 0
      %p56 = por %p54, %p55
      %p57 = scmp.ne.s32.totalorder %s49, %s51
      %p58 = scmp.eq.s32.totalorder %s25, 3
      %p59 = por %p57, %p58
      %p60 = scmp.ne.s32.totalorder %s51, %s52
      %p61 = scmp.eq.s32.totalorder %s25, 0
      %p62 = por %p60, %p61
      %p63 = scmp.ne.s32.totalorder %s51, %s52
      %p64 = scmp.eq.s32.totalorder %s26, 3
      %p65 = por %p63, %p64
      %p67 = scmp.ne.s32.totalorder %s52, %s66
      %p68 = scmp.eq.s32.totalorder %s26, 0
      %p69 = por %p67, %p68
      %s70 = ssub.s32 %s20, %s27
      %p71 = scmp.eq.s32.totalorder %s70, 0
      %s73 = sadd.s32 %s72, 1
      %s74 = scalar_select %p71, %s72, %s73
      %p77 = pneg %p71
      %p78 = scmp.eq.s32.totalorder %s20, 3
      %p79 = por %p77, %p78
      %p80 = scmp.ne.s32.totalorder %s72, %s75
      %p81 = scmp.eq.s32.totalorder %s20, 0
      %p82 = por %p80, %p81
      %p83 = scmp.ne.s32.totalorder %s72, %s75
      %p84 = scmp.eq.s32.totalorder %s25, 3
      %p85 = por %p83, %p84
      %p86 = scmp.ne.s32.totalorder %s75, %s76
      %p87 = scmp.eq.s32.totalorder %s25, 0
      %p88 = por %p86, %p87
      %p89 = scmp.ne.s32.totalorder %s75, %s76
      %p90 = scmp.eq.s32.totalorder %s26, 3
      %p91 = por %p89, %p90
      %p93 = scmp.ne.s32.totalorder %s76, %s92
      %p94 = scmp.eq.s32.totalorder %s26, 0
      %p95 = por %p93, %p94
      %s96 = ssub.s32 %s20, %s27
      %p97 = scmp.eq.s32.totalorder %s96, 0
      %s99 = sadd.s32 %s98, 1
      %s100 = scalar_select %p97, %s98, %s99
      %p103 = pneg %p97
      %p104 = scmp.eq.s32.totalorder %s20, 3
      %p105 = por %p103, %p104
      %p106 = scmp.ne.s32.totalorder %s98, %s101
      %p107 = scmp.eq.s32.totalorder %s20, 0
      %p108 = por %p106, %p107
      %p109 = scmp.ne.s32.totalorder %s98, %s101
      %p110 = scmp.eq.s32.totalorder %s25, 3
      %p111 = por %p109, %p110
      %p112 = scmp.ne.s32.totalorder %s101, %s102
      %p113 = scmp.eq.s32.totalorder %s25, 0
      %p114 = por %p112, %p113
      %p115 = scmp.ne.s32.totalorder %s101, %s102
      %p116 = scmp.eq.s32.totalorder %s26, 3
      %p117 = por %p115, %p116
      %p119 = scmp.ne.s32.totalorder %s102, %s118
      %p120 = scmp.eq.s32.totalorder %s26, 0
      %p121 = por %p119, %p120
      %s122 = ssub.s32 %s20, %s27
      %p123 = scmp.eq.s32.totalorder %s122, 0
      %s125 = sadd.s32 %s124, 1
      %s126 = scalar_select %p123, %s124, %s125
      %p129 = pneg %p123
      %p130 = scmp.eq.s32.totalorder %s20, 3
      %p131 = por %p129, %p130
      %p132 = scmp.ne.s32.totalorder %s124, %s127
      %p133 = scmp.eq.s32.totalorder %s20, 0
      %p134 = por %p132, %p133
      %p135 = scmp.ne.s32.totalorder %s124, %s127
      %p136 = scmp.eq.s32.totalorder %s25, 3
      %p137 = por %p135, %p136
      %p138 = scmp.ne.s32.totalorder %s127, %s128
      %p139 = scmp.eq.s32.totalorder %s25, 0
      %p140 = por %p138, %p139
      %p141 = scmp.ne.s32.totalorder %s127, %s128
      %p142 = scmp.eq.s32.totalorder %s26, 3
      %p143 = por %p141, %p142
      %p145 = scmp.ne.s32.totalorder %s128, %s144
      %p146 = scmp.eq.s32.totalorder %s26, 0
      %p147 = por %p145, %p146
      %s148 = ssub.s32 %s20, %s27
      %p149 = scmp.eq.s32.totalorder %s148, 0
      %s151 = sadd.s32 %s150, 1
      %s152 = scalar_select %p149, %s150, %s151
      %p155 = pneg %p149
      %p156 = scmp.eq.s32.totalorder %s20, 3
      %p157 = por %p155, %p156
      %p158 = scmp.ne.s32.totalorder %s150, %s153
      %p159 = scmp.eq.s32.totalorder %s20, 0
      %p160 = por %p158, %p159
      %p161 = scmp.ne.s32.totalorder %s150, %s153
      %p162 = scmp.eq.s32.totalorder %s25, 3
      %p163 = por %p161, %p162
      %p164 = scmp.ne.s32.totalorder %s153, %s154
      %p165 = scmp.eq.s32.totalorder %s25, 0
      %p166 = por %p164, %p165
      %p167 = scmp.ne.s32.totalorder %s153, %s154
      %p168 = scmp.eq.s32.totalorder %s26, 3
      %p169 = por %p167, %p168
      %p171 = scmp.ne.s32.totalorder %s154, %s170
      %p172 = scmp.eq.s32.totalorder %s26, 0
      %p173 = por %p171, %p172
      %p174 = scmp.le.s32.totalorder 1, %s20
      %p175 = scmp.lt.s32.totalorder %s20, 5
      %p176 = pnand %p174, %p175
      %p177 = pneg %p176
      // Predicated region
      $region9: #{tpu_custom_call.1} parent=5 // pred_check
        _
      $region10: #{tpu_custom_call.1} parent=5 // pred_check_branch
        %179 = sbr.rel (%p176) target = $region12
      $region11: #{tpu_custom_call.1} parent=5 // pred_region
        %s180 = ssub.s32 %s20, 1
        // Predicated region
        $region13: #{tpu_custom_call.1} parent=11 // pred_check
          %p181 = pneg %p41
        $region14: #{tpu_custom_call.1} parent=11 // pred_check_branch
          %183 = sbr.rel (%p181) target = $region16
        $region15: #{tpu_custom_call.1} parent=11 // pred_region
          _
        $region16: #{tpu_custom_call.1} parent=11 // pred_fallthru
          _
        // Predicated region
        $region17: #{tpu_custom_call.1} parent=11 // pred_check
          %p184 = pneg %p62
        $region18: #{tpu_custom_call.1} parent=11 // pred_check_branch
          %186 = sbr.rel (%p184) target = $region20
        $region19: #{tpu_custom_call.1} parent=11 // pred_region
          _
        $region20: #{tpu_custom_call.1} parent=11 // pred_fallthru
          _
      $region12: #{tpu_custom_call.1} parent=5 // pred_fallthru
        _
      %p187 = scmp.lt.s32.totalorder %s20, 4
      // Predicated region
      $region21: #{tpu_custom_call.1} parent=5 // pred_check
        %p188 = pneg %p187
      $region22: #{tpu_custom_call.1} parent=5 // pred_check_branch
        %190 = sbr.rel (%p188) target = $region24
      $region23: #{tpu_custom_call.1} parent=5 // pred_region
        // Predicated region
        $region25: #{tpu_custom_call.1} parent=23 // pred_check
          %p191 = pneg %p82
        $region26: #{tpu_custom_call.1} parent=23 // pred_check_branch
          %193 = sbr.rel (%p191) target = $region28
        $region27: #{tpu_custom_call.1} parent=23 // pred_region
          %s194 = smul.u32 2, %s20
          %p195 = scmp.lt.s32.totalorder %s194, 7
          %s196 = scalar_select %p195, %s194, 7
          %s197 = smul.addr %s196, 4
          %s198 = scalar_lea.vmem %s2, %s197
          %s199 = smul.u32 2, %s20
        $region28: #{tpu_custom_call.1} parent=23 // pred_fallthru
          _
        // Predicated region
        $region29: #{tpu_custom_call.1} parent=23 // pred_check
          %p200 = pneg %p108
        $region30: #{tpu_custom_call.1} parent=23 // pred_check_branch
          %202 = sbr.rel (%p200) target = $region32
        $region31: #{tpu_custom_call.1} parent=23 // pred_region
          %s203 = sand.u32 %s98, 1
          %s204 = scalar_lea.sflag [#allocation3], %s203
          %s205 = sand.u32 %s98, 1
          %s206 = smul.addr %s205, 16
          %s207 = scalar_lea.vmem [#allocation2], %s206
          %s208 = smul.u32 2, %s20
          %210 = vsyncadd %s204, 0
          %s211 = smul.addr %s208, 8
          %s212 = scalar_lea.hbm %s3, %s211
          %s214 = sshll.u32 %s212, 4
          %s215 = int_to_ptr.hbm [resolvable:$true] %s214
          %s216 = sshll.u32 %s207, 4
          %s217 = int_to_ptr.vmem [resolvable:$true] %s216
          %219 = dma.hbm_to_vmem [thread:$0]  %s215, 256, %s217, %s204
        $region32: #{tpu_custom_call.1} parent=23 // pred_fallthru
          _
        // Predicated region
        $region33: #{tpu_custom_call.1} parent=23 // pred_check
          %p220 = pneg %p134
        $region34: #{tpu_custom_call.1} parent=23 // pred_check_branch
          %222 = sbr.rel (%p220) target = $region36
        $region35: #{tpu_custom_call.1} parent=23 // pred_region
          %s223 = sand.u32 %s124, 1
          %s224 = scalar_lea.sflag [#allocation6], %s223
          %s225 = sand.u32 %s124, 1
          %s226 = smul.addr %s225, 64
          %s227 = scalar_lea.vmem [#allocation5], %s226
          %s228 = smul.u32 2, %s20
          %230 = vsyncadd %s224, 0
          %s231 = smul.addr %s228, 4
          %s232 = scalar_lea.hbm %s4, %s231
          %s233 = sshll.u32 %s232, 4
          %s234 = int_to_ptr.hbm [resolvable:$true] %s233
          %s235 = sshll.u32 %s227, 4
          %s236 = int_to_ptr.vmem [resolvable:$true] %s235
          %241 = dma.hbm_to_vmem [thread:$0]  %s234, 1024, %s236, %s224, 512, 128, 8
        $region36: #{tpu_custom_call.1} parent=23 // pred_fallthru
          _
      $region24: #{tpu_custom_call.1} parent=5 // pred_fallthru
        _
      %p242 = scmp.le.s32.totalorder 1, %s20
      %p243 = scmp.lt.s32.totalorder %s20, 5
      %p244 = pnand %p242, %p243
      %p245 = pneg %p244
      // Predicated region
      $region37: #{tpu_custom_call.1} parent=5 // pred_check
        _
      $region38: #{tpu_custom_call.1} parent=5 // pred_check_branch
        %247 = sbr.rel (%p244) target = $region40
      $region39: #{tpu_custom_call.1} parent=5 // pred_region
        %s248 = ssub.s32 %s20, 1
        %s249 = sand.u32 %s101, 1
        %s250 = scalar_lea.sflag [#allocation3], %s249
        %s251 = sand.u32 %s101, 1
        %s252 = smul.addr %s251, 16
        %s253 = scalar_lea.vmem [#allocation2], %s252
        // Predicated region
        $region41: #{tpu_custom_call.1} parent=39 // pred_check
          %p254 = pneg %p114
        $region42: #{tpu_custom_call.1} parent=39 // pred_check_branch
          %256 = sbr.rel (%p254) target = $region44
        $region43: #{tpu_custom_call.1} parent=39 // pred_region
          %258 = dma.done %s250, 256
        $region44: #{tpu_custom_call.1} parent=39 // pred_fallthru
          _
        %s259 = sand.u32 %s127, 1
        %s260 = scalar_lea.sflag [#allocation6], %s259
        %s261 = sand.u32 %s127, 1
        %s262 = smul.addr %s261, 64
        %s263 = scalar_lea.vmem [#allocation5], %s262
        // Predicated region
        $region45: #{tpu_custom_call.1} parent=39 // pred_check
          %p264 = pneg %p140
        $region46: #{tpu_custom_call.1} parent=39 // pred_check_branch
          %266 = sbr.rel (%p264) target = $region48
        $region47: #{tpu_custom_call.1} parent=39 // pred_region
          %268 = dma.done %s260, 1024
        $region48: #{tpu_custom_call.1} parent=39 // pred_fallthru
          _
        %p269 = pneg %p41
        %p270 = pneg %p38
        %p271 = pneg %p62
        %p272 = pneg %p59
        %s273 = smul.u32 2, %s25
        %p274 = scmp.lt.s32.totalorder %s273, 7
        %s275 = scalar_select %p274, %s273, 7
        %s276 = smul.addr %s275, 4
        %s277 = scalar_lea.vmem %s2, %s276
        %p278 = pneg %p88
        %p279 = pneg %p85
        %s280 = sand.u32 %s101, 1
        %s281 = scalar_lea.sflag [#allocation3], %s280
        %s282 = sand.u32 %s101, 1
        %s283 = smul.addr %s282, 16
        %s284 = scalar_lea.vmem [#allocation2], %s283
        %p285 = pneg %p114
        %p286 = pneg %p111
        %s287 = sand.u32 %s127, 1
        %s288 = scalar_lea.sflag [#allocation6], %s287
        %s289 = sand.u32 %s127, 1
        %s290 = smul.addr %s289, 64
        %s291 = scalar_lea.vmem [#allocation5], %s290
        %p292 = pneg %p140
        %p293 = pneg %p137
        %p294 = pneg %p166
        %p295 = pneg %p163
        %s296 = sand.u32 %s153, 1
        %s297 = scalar_lea.sflag [#allocation4], %s296
        %s298 = sand.u32 %s153, 1
        %s299 = smul.addr %s298, 4
        %s300 = scalar_lea.vmem [#allocation7], %s299
        %s301 = smul.u32 2, %s25
        %p302 = scmp.lt.s32.totalorder %s301, 7
        %s303 = scalar_select %p302, %s301, 7
        %s304 = smul.addr %s303, 4
        %s305 = scalar_lea.vmem %s2, %s304
        %s306 = smul.u32 2, %s25
        %s307 = smul.u32 2, %s25
        %s308 = smul.u32 2, %s25
        %s309 = smul.u32 2, %s25
        %v310 = vld [vmem:[%s0] sm:$0xff]
        %v311 = vld [vmem:[%s0 + $0x8] sm:$0xff]
        %v312 = vld [vmem:[%s1] sm:$0xff]
        %v313 = vld [vmem:[%s1 + $0x8] sm:$0xff]
        %v314 = vld [vmem:[%s305] sm:$0xff]
        %316 = vst [vmem:[#allocation1] ss:$2 sm:$0xff] %v314
        %v317 = vld.sshfl [vmem:[#allocation1] sm:$0xff pattern:$0x75316420]
        %v318 = vld.sshfl [vmem:[#allocation1 + $0x8] sm:$0xff pattern:$0x75316420]
        %vm319 = vcmask 31744
        %v321 = vsel %vm319, %v312, 0
        %v324 = vsel %vm319, %v313, 0
        %vm326 = vcmask 1043456
        %v327 = vsel %vm326, %v317, 0
        %v329 = vsel %vm326, %v318, 0
        %331 = vmatpush.msra.mxu0 0.0
        %332 = vmatpush.msra.mxu0 0.0
        %333 = vmatpush.msra.mxu0 0.0
        %334 = vmatpush.msra.mxu0 0.0
        %335 = vmatpush.msra.mxu0 0.0
        %336 = vmatpush.msra.mxu0 0.0
        %337 = vmatpush.msra.mxu0 0.0
        %338 = vmatpush.msra.mxu0 0.0
        %339 = vmatpush.msra.mxu0 0.0
        %340 = vmatpush.msra.mxu0 0.0
        %341 = vmatpush.msra.mxu0 0.0
        %342 = vmatpush.msra.mxu0 0.0
        %343 = vmatpush.msra.mxu0 0.0
        %344 = vmatpush.msra.mxu0 0.0
        %345 = vmatpush.msra.mxu0 0.0
        %346 = vmatpush.msra.mxu0 %v327
        %347 = vmatmul.f32.gmra.mxu0 %v321
        %v348 = vpop.f32.mrf.mxu0
        %v349 = vadd.f32 0.0, %v348
        %350 = vmatmul.f32.gmra.mxu0 %v324
        %v351 = vpop.f32.mrf.mxu0
        %v352 = vadd.f32 0.0, %v351
        %353 = vdwg.mxu0
        %354 = vmatpush.msra.mxu0 0.0
        %355 = vmatpush.msra.mxu0 0.0
        %356 = vmatpush.msra.mxu0 0.0
        %357 = vmatpush.msra.mxu0 0.0
        %358 = vmatpush.msra.mxu0 0.0
        %359 = vmatpush.msra.mxu0 0.0
        %360 = vmatpush.msra.mxu0 0.0
        %361 = vmatpush.msra.mxu0 0.0
        %362 = vmatpush.msra.mxu0 0.0
        %363 = vmatpush.msra.mxu0 0.0
        %364 = vmatpush.msra.mxu0 0.0
        %365 = vmatpush.msra.mxu0 0.0
        %366 = vmatpush.msra.mxu0 0.0
        %367 = vmatpush.msra.mxu0 0.0
        %368 = vmatpush.msra.mxu0 0.0
        %369 = vmatpush.msra.mxu0 %v329
        %370 = vmatmul.f32.gmra.mxu0 %v321
        %v371 = vpop.f32.mrf.mxu0
        %v372 = vadd.f32 0.0, %v371
        %373 = vmatmul.f32.gmra.mxu0 %v324
        %v374 = vpop.f32.mrf.mxu0
        %v375 = vadd.f32 0.0, %v374
        %376 = vdwg.mxu0
        %v377 = vmul.f32 %v349, %v349
        %v378 = vmul.f32 %v372, %v372
        %v379 = vmul.f32 %v352, %v352
        %v380 = vmul.f32 %v375, %v375
        %v381 = vrcp.pop %v377
        %v382 = vrcp.pop %v378
        %v383 = vrcp.pop %v379
        %v384 = vrcp.pop %v380
        %v385 = vld [vmem:[%s263] sm:$0xff]
        %v386 = vld [vmem:[%s263 + $0x8] sm:$0xff]
        %v387 = vunpack.c.l.bf16 %v385
        %v388 = vunpack.c.h.bf16 %v385
        %v389 = vunpack.c.l.bf16 %v386
        %v390 = vunpack.c.h.bf16 %v386
        %v391 = vld [vmem:[%s253] ss:$8 sm:$0x3]
        %v393 = vperm.slane %v391, 0
        %v394 = vperm.slane %v391, 1
        %v397 = vmul.f32 %v393, %v381
        %v398 = vmul.f32 %v394, %v382
        %v399 = vmul.f32 %v393, %v383
        %v400 = vmul.f32 %v394, %v384
        %v401 = vsub.f32 1.0, %v397
        %v402 = vsub.f32 1.0, %v398
        %v403 = vsub.f32 1.0, %v399
        %v404 = vsub.f32 1.0, %v400
        %v405 = vmax.f32 %v401, 0.0
        %v406 = vmax.f32 %v402, 0.0
        %v407 = vmax.f32 %v403, 0.0
        %v408 = vmax.f32 %v404, 0.0
        %v409 = vmul.f32 %v387, %v405
        %v410 = vmul.f32 %v388, %v406
        %v411 = vmul.f32 %v387, %v407
        %v412 = vmul.f32 %v388, %v408
        %s413 = scalar_lea.vmem %s253, 1 [#allocation2]
        %v414 = vld [vmem:[%s413] ss:$8 sm:$0x3]
        %v416 = vperm.slane %v414, 0
        %v417 = vperm.slane %v414, 1
        %v420 = vmul.f32 %v416, %v381
        %v421 = vmul.f32 %v417, %v382
        %v422 = vmul.f32 %v416, %v383
        %v423 = vmul.f32 %v417, %v384
        %v424 = vsub.f32 1.0, %v420
        %v425 = vsub.f32 1.0, %v421
        %v426 = vsub.f32 1.0, %v422
        %v427 = vsub.f32 1.0, %v423
        %v428 = vmax.f32 %v424, 0.0
        %v429 = vmax.f32 %v425, 0.0
        %v430 = vmax.f32 %v426, 0.0
        %v431 = vmax.f32 %v427, 0.0
        %v432 = vadd.f32 %v405, %v428
        %v433 = vadd.f32 %v406, %v429
        %v434 = vadd.f32 %v407, %v430
        %v435 = vadd.f32 %v408, %v431
        %v436 = vmul.f32 %v389, %v428
        %v437 = vmul.f32 %v390, %v429
        %v438 = vmul.f32 %v389, %v430
        %v439 = vmul.f32 %v390, %v431
        %v440 = vadd.f32 %v409, %v436
        %v441 = vadd.f32 %v410, %v437
        %v442 = vadd.f32 %v411, %v438
        %v443 = vadd.f32 %v412, %v439
        %v444 = vld [vmem:[%s263 + $0x10] sm:$0xff]
        %v445 = vld [vmem:[%s263 + $0x18] sm:$0xff]
        %v446 = vunpack.c.l.bf16 %v444
        %v447 = vunpack.c.h.bf16 %v444
        %v448 = vunpack.c.l.bf16 %v445
        %v449 = vunpack.c.h.bf16 %v445
        %s450 = scalar_lea.vmem %s253, 2 [#allocation2]
        %v451 = vld [vmem:[%s450] ss:$8 sm:$0x3]
        %v453 = vperm.slane %v451, 0
        %v454 = vperm.slane %v451, 1
        %v457 = vmul.f32 %v453, %v381
        %v458 = vmul.f32 %v454, %v382
        %v459 = vmul.f32 %v453, %v383
        %v460 = vmul.f32 %v454, %v384
        %v461 = vsub.f32 1.0, %v457
        %v462 = vsub.f32 1.0, %v458
        %v463 = vsub.f32 1.0, %v459
        %v464 = vsub.f32 1.0, %v460
        %v465 = vmax.f32 %v461, 0.0
        %v466 = vmax.f32 %v462, 0.0
        %v467 = vmax.f32 %v463, 0.0
        %v468 = vmax.f32 %v464, 0.0
        %v469 = vadd.f32 %v432, %v465
        %v470 = vadd.f32 %v433, %v466
        %v471 = vadd.f32 %v434, %v467
        %v472 = vadd.f32 %v435, %v468
        %v473 = vmul.f32 %v446, %v465
        %v474 = vmul.f32 %v447, %v466
        %v475 = vmul.f32 %v446, %v467
        %v476 = vmul.f32 %v447, %v468
        %v477 = vadd.f32 %v440, %v473
        %v478 = vadd.f32 %v441, %v474
        %v479 = vadd.f32 %v442, %v475
        %v480 = vadd.f32 %v443, %v476
        %s481 = scalar_lea.vmem %s253, 3 [#allocation2]
        %v482 = vld [vmem:[%s481] ss:$8 sm:$0x3]
        %v484 = vperm.slane %v482, 0
        %v485 = vperm.slane %v482, 1
        %v488 = vmul.f32 %v484, %v381
        %v489 = vmul.f32 %v485, %v382
        %v490 = vmul.f32 %v484, %v383
        %v491 = vmul.f32 %v485, %v384
        %v492 = vsub.f32 1.0, %v488
        %v493 = vsub.f32 1.0, %v489
        %v494 = vsub.f32 1.0, %v490
        %v495 = vsub.f32 1.0, %v491
        %v496 = vmax.f32 %v492, 0.0
        %v497 = vmax.f32 %v493, 0.0
        %v498 = vmax.f32 %v494, 0.0
        %v499 = vmax.f32 %v495, 0.0
        %v500 = vadd.f32 %v469, %v496
        %v501 = vadd.f32 %v470, %v497
        %v502 = vadd.f32 %v471, %v498
        %v503 = vadd.f32 %v472, %v499
        %v504 = vmul.f32 %v448, %v496
        %v505 = vmul.f32 %v449, %v497
        %v506 = vmul.f32 %v448, %v498
        %v507 = vmul.f32 %v449, %v499
        %v508 = vadd.f32 %v477, %v504
        %v509 = vadd.f32 %v478, %v505
        %v510 = vadd.f32 %v479, %v506
        %v511 = vadd.f32 %v480, %v507
        %v512 = vld [vmem:[%s263 + $0x20] sm:$0xff]
        %v513 = vld [vmem:[%s263 + $0x28] sm:$0xff]
        %v514 = vunpack.c.l.bf16 %v512
        %v515 = vunpack.c.h.bf16 %v512
        %v516 = vunpack.c.l.bf16 %v513
        %v517 = vunpack.c.h.bf16 %v513
        %s518 = scalar_lea.vmem %s253, 4 [#allocation2]
        %v519 = vld [vmem:[%s518] ss:$8 sm:$0x3]
        %v521 = vperm.slane %v519, 0
        %v522 = vperm.slane %v519, 1
        %v525 = vmul.f32 %v521, %v381
        %v526 = vmul.f32 %v522, %v382
        %v527 = vmul.f32 %v521, %v383
        %v528 = vmul.f32 %v522, %v384
        %v529 = vsub.f32 1.0, %v525
        %v530 = vsub.f32 1.0, %v526
        %v531 = vsub.f32 1.0, %v527
        %v532 = vsub.f32 1.0, %v528
        %v533 = vmax.f32 %v529, 0.0
        %v534 = vmax.f32 %v530, 0.0
        %v535 = vmax.f32 %v531, 0.0
        %v536 = vmax.f32 %v532, 0.0
        %v537 = vadd.f32 %v500, %v533
        %v538 = vadd.f32 %v501, %v534
        %v539 = vadd.f32 %v502, %v535
        %v540 = vadd.f32 %v503, %v536
        %v541 = vmul.f32 %v514, %v533
        %v542 = vmul.f32 %v515, %v534
        %v543 = vmul.f32 %v514, %v535
        %v544 = vmul.f32 %v515, %v536
        %v545 = vadd.f32 %v508, %v541
        %v546 = vadd.f32 %v509, %v542
        %v547 = vadd.f32 %v510, %v543
        %v548 = vadd.f32 %v511, %v544
        %s549 = scalar_lea.vmem %s253, 5 [#allocation2]
        %v550 = vld [vmem:[%s549] ss:$8 sm:$0x3]
        %v552 = vperm.slane %v550, 0
        %v553 = vperm.slane %v550, 1
        %v556 = vmul.f32 %v552, %v381
        %v557 = vmul.f32 %v553, %v382
        %v558 = vmul.f32 %v552, %v383
        %v559 = vmul.f32 %v553, %v384
        %v560 = vsub.f32 1.0, %v556
        %v561 = vsub.f32 1.0, %v557
        %v562 = vsub.f32 1.0, %v558
        %v563 = vsub.f32 1.0, %v559
        %v564 = vmax.f32 %v560, 0.0
        %v565 = vmax.f32 %v561, 0.0
        %v566 = vmax.f32 %v562, 0.0
        %v567 = vmax.f32 %v563, 0.0
        %v568 = vadd.f32 %v537, %v564
        %v569 = vadd.f32 %v538, %v565
        %v570 = vadd.f32 %v539, %v566
        %v571 = vadd.f32 %v540, %v567
        %v572 = vmul.f32 %v516, %v564
        %v573 = vmul.f32 %v517, %v565
        %v574 = vmul.f32 %v516, %v566
        %v575 = vmul.f32 %v517, %v567
        %v576 = vadd.f32 %v545, %v572
        %v577 = vadd.f32 %v546, %v573
        %v578 = vadd.f32 %v547, %v574
        %v579 = vadd.f32 %v548, %v575
        %v580 = vld [vmem:[%s263 + $0x30] sm:$0xff]
        %v581 = vld [vmem:[%s263 + $0x38] sm:$0xff]
        %v582 = vunpack.c.l.bf16 %v580
        %v583 = vunpack.c.h.bf16 %v580
        %v584 = vunpack.c.l.bf16 %v581
        %v585 = vunpack.c.h.bf16 %v581
        %s586 = scalar_lea.vmem %s253, 6 [#allocation2]
        %v587 = vld [vmem:[%s586] ss:$8 sm:$0x3]
        %v589 = vperm.slane %v587, 0
        %v590 = vperm.slane %v587, 1
        %v593 = vmul.f32 %v589, %v381
        %v594 = vmul.f32 %v590, %v382
        %v595 = vmul.f32 %v589, %v383
        %v596 = vmul.f32 %v590, %v384
        %v597 = vsub.f32 1.0, %v593
        %v598 = vsub.f32 1.0, %v594
        %v599 = vsub.f32 1.0, %v595
        %v600 = vsub.f32 1.0, %v596
        %v601 = vmax.f32 %v597, 0.0
        %v602 = vmax.f32 %v598, 0.0
        %v603 = vmax.f32 %v599, 0.0
        %v604 = vmax.f32 %v600, 0.0
        %v605 = vadd.f32 %v568, %v601
        %v606 = vadd.f32 %v569, %v602
        %v607 = vadd.f32 %v570, %v603
        %v608 = vadd.f32 %v571, %v604
        %v609 = vmul.f32 %v582, %v601
        %v610 = vmul.f32 %v583, %v602
        %v611 = vmul.f32 %v582, %v603
        %v612 = vmul.f32 %v583, %v604
        %v613 = vadd.f32 %v576, %v609
        %v614 = vadd.f32 %v577, %v610
        %v615 = vadd.f32 %v578, %v611
        %v616 = vadd.f32 %v579, %v612
        %s617 = scalar_lea.vmem %s253, 7 [#allocation2]
        %v618 = vld [vmem:[%s617] ss:$8 sm:$0x3]
        %v620 = vperm.slane %v618, 0
        %v621 = vperm.slane %v618, 1
        %v624 = vmul.f32 %v620, %v381
        %v625 = vmul.f32 %v621, %v382
        %v626 = vmul.f32 %v620, %v383
        %v627 = vmul.f32 %v621, %v384
        %v628 = vsub.f32 1.0, %v624
        %v629 = vsub.f32 1.0, %v625
        %v630 = vsub.f32 1.0, %v626
        %v631 = vsub.f32 1.0, %v627
        %v632 = vmax.f32 %v628, 0.0
        %v633 = vmax.f32 %v629, 0.0
        %v634 = vmax.f32 %v630, 0.0
        %v635 = vmax.f32 %v631, 0.0
        %v636 = vadd.f32 %v605, %v632
        %v637 = vadd.f32 %v606, %v633
        %v638 = vadd.f32 %v607, %v634
        %v639 = vadd.f32 %v608, %v635
        %v640 = vmul.f32 %v584, %v632
        %v641 = vmul.f32 %v585, %v633
        %v642 = vmul.f32 %v584, %v634
        %v643 = vmul.f32 %v585, %v635
        %v644 = vadd.f32 %v613, %v640
        %v645 = vadd.f32 %v614, %v641
        %v646 = vadd.f32 %v615, %v642
        %v647 = vadd.f32 %v616, %v643
        %v648 = vrcp.pop %v636
        %v649 = vrcp.pop %v637
        %v650 = vrcp.pop %v638
        %v651 = vrcp.pop %v639
        %v652 = vmul.f32 %v644, %v648
        %v653 = vmul.f32 %v645, %v649
        %v654 = vmul.f32 %v646, %v650
        %v655 = vmul.f32 %v647, %v651
        %657 = vset.pattern.permute.xlu0 0
        %658 = vperm.xlu0 %657, %v310
        %v659 = vpop.permute.xlu0 %658
        %662 = vset.pattern.permute.xlu0 0
        %663 = vperm.xlu0 %662, %v311
        %v664 = vpop.permute.xlu0 %663
        %v666 = vmul.f32 %v659, %v652
        %v667 = vmul.f32 %v659, %v653
        %v668 = vmul.f32 %v664, %v654
        %v669 = vmul.f32 %v664, %v655
        %v670 = vrot.slane %v666, 4
        %v671 = vadd.f32 %v666, %v670
        %v672 = vrot.slane %v671, 2
        %v673 = vadd.f32 %v671, %v672
        %v674 = vrot.slane %v673, 1
        %v675 = vadd.f32 %v673, %v674
        %v676 = vrot.slane %v667, 4
        %v677 = vadd.f32 %v667, %v676
        %v678 = vrot.slane %v677, 2
        %v679 = vadd.f32 %v677, %v678
        %v680 = vrot.slane %v679, 1
        %v681 = vadd.f32 %v679, %v680
        %v682 = vrot.slane %v668, 4
        %v683 = vadd.f32 %v668, %v682
        %v684 = vrot.slane %v683, 2
        %v685 = vadd.f32 %v683, %v684
        %v686 = vrot.slane %v685, 1
        %v687 = vadd.f32 %v685, %v686
        %v688 = vrot.slane %v669, 4
        %v689 = vadd.f32 %v669, %v688
        %v690 = vrot.slane %v689, 2
        %v691 = vadd.f32 %v689, %v690
        %v692 = vrot.slane %v691, 1
        %v693 = vadd.f32 %v691, %v692
        %v698 = vrot.slane %v681, 6
        %v699 = vrot.slane %v693, 6
        %vm700 = vcmask 1041408
        %v701 = vsel %vm700, %v675, %v698
        %v702 = vsel %vm700, %v687, %v699
        %vm703 = vcmask 1044484
        %v704 = vsel %vm703, %v701, %v701
        %vm705 = vcmask 1046534
        %v706 = vsel %vm705, %v701, %v704
        %v707 = vrot.slane %v702, 7
        %vm708 = vcmask 1041409
        %v709 = vsel %vm708, %v707, %v706
        %vm710 = vcmask 1043459
        %v711 = vsel %vm710, %v707, %v709
        %vm712 = vcmask 1045509
        %v713 = vsel %vm712, %v707, %v711
        %vm714 = vcmask 1047559
        %v715 = vsel %vm714, %v707, %v713
        %717 = vst [vmem:[%s300] sm:$0xf] %v715
        %s718 = sand.u32 %s153, 1
        %s719 = scalar_lea.sflag [#allocation4], %s718
        %s720 = sand.u32 %s153, 1
        %s721 = smul.addr %s720, 4
        %s722 = scalar_lea.vmem [#allocation7], %s721
        // Predicated region
        $region49: #{tpu_custom_call.1} parent=39 // pred_check
          %p723 = pneg %p163
        $region50: #{tpu_custom_call.1} parent=39 // pred_check_branch
          %725 = sbr.rel (%p723) target = $region52
        $region51: #{tpu_custom_call.1} parent=39 // pred_region
          %s726 = smul.u32 2, %s25
          %728 = vsyncadd %s719, 0
          %s729 = smul.addr %s726, 2
          %s730 = scalar_lea.hbm %s5, %s729
          %s732 = sshll.u32 %s722, 4
          %s733 = int_to_ptr.vmem [resolvable:$true] %s732
          %s734 = sshll.u32 %s730, 4
          %s735 = int_to_ptr.hbm [resolvable:$true] %s734
          %737 = dma.vmem_to_hbm [thread:$0]  %s733, 64, %s735, %s719
        $region52: #{tpu_custom_call.1} parent=39 // pred_fallthru
          _
      $region40: #{tpu_custom_call.1} parent=5 // pred_fallthru
        _
      %p738 = scmp.le.s32.totalorder 2, %s20
      // Predicated region
      $region53: #{tpu_custom_call.1} parent=5 // pred_check
        %p739 = pneg %p738
      $region54: #{tpu_custom_call.1} parent=5 // pred_check_branch
        %741 = sbr.rel (%p739) target = $region56
      $region55: #{tpu_custom_call.1} parent=5 // pred_region
        %s742 = ssub.s32 %s20, 2
        // Predicated region
        $region57: #{tpu_custom_call.1} parent=55 // pred_check
          %p743 = pneg %p169
        $region58: #{tpu_custom_call.1} parent=55 // pred_check_branch
          %745 = sbr.rel (%p743) target = $region60
        $region59: #{tpu_custom_call.1} parent=55 // pred_region
          %s746 = sand.u32 %s154, 1
          %s747 = scalar_lea.sflag [#allocation4], %s746
          %s748 = sand.u32 %s154, 1
          %s749 = smul.addr %s748, 4
          %s750 = scalar_lea.vmem [#allocation7], %s749
          %752 = dma.done %s747, 64
        $region60: #{tpu_custom_call.1} parent=55 // pred_fallthru
          _
      $region56: #{tpu_custom_call.1} parent=5 // pred_fallthru
        _
    $region6: #{tpu_custom_call.1} parent=1 // loop_footer
      %s24 = sadd.s32 1, %s20
    $region7: #{tpu_custom_call.1} parent=1 // loop_footer_branch
      %19 = sbr.rel target = $region3
    $region8: #{tpu_custom_call.1} parent=1 // loop_exit
      _
    %753 = vsyncpa [#allocation3], 1
    %s754 = scalar_lea.sflag [#allocation3], 1
    %755 = vsyncpa %s754, 1
    %756 = vsyncpa [#allocation6], 1
    %s757 = scalar_lea.sflag [#allocation6], 1
    %758 = vsyncpa %s757, 1
    %759 = vsyncpa [#allocation4], 1
    %s760 = scalar_lea.sflag [#allocation4], 1
    %761 = vsyncpa %s760, 1

</llo_original>
